<compile_context>
chip_gen: v5e
topology: v5e:2x2
jax: 0.10.0
libtpu: 0.0.40
codegen_flags: <defaults>
</compile_context>

<pallas_src>
import math

import jax
import jax.numpy as jnp
from jax.experimental import pallas as pl
from jax.experimental.pallas import tpu as pltpu


def _round_up(x: int, m: int) -> int:
    return ((x + m - 1) // m) * m


def _mlp_swish_kernel(x_ref, w1_ref, b1_ref, w2_ref, b2_ref, w3_ref, b3_ref,
                      w4_ref, b4_ref, o_ref):
    # x_ref : (tm, in_dim)        VMEM, row tile of the (row-padded) batch
    # wk_ref: (d_in_k, d_out_k)   VMEM, bf16, resident across all grid steps
    # bk_ref: (1, d_out_k)        VMEM, f32,  resident
    # o_ref : (tm, out_dim)       VMEM, f32

    def linear(h, w_ref, b_ref):
        # bf16 operands -> native MXU rate; accumulate + bias add in f32.
        return jnp.dot(h.astype(jnp.bfloat16), w_ref[...],
                       preferred_element_type=jnp.float32) + b_ref[...]

    def swish(h):
        # x * sigmoid(x) == x * 1/(1+exp(-x)); exp and approx reciprocal both
        # issue on the EUP slot, keeping the VALU free.
        return h * pl.reciprocal(1.0 + jnp.exp(-h), approx=True)

    h = x_ref[...]
    h = swish(linear(h, w1_ref, b1_ref))
    h = swish(linear(h, w2_ref, b2_ref))
    h = swish(linear(h, w3_ref, b3_ref))
    h = linear(h, w4_ref, b4_ref)
    o_ref[...] = h.astype(o_ref.dtype)


def prepare_dino_params(params):
    """One-time conversion of torch-layout params (hoist out of the ODE loop).

    Input : 'w1'..'w4' in torch (out, in) layout, 'b1'..'b4' of shape (out,).
    Output: 'w1'..'w4' as bf16 (in, out); 'b1'..'b4' as f32 (1, out).
    """
    prep = {}
    for i in range(1, 5):
        prep[f"w{i}"] = jnp.asarray(params[f"w{i}"]).T.astype(jnp.bfloat16)
        prep[f"b{i}"] = jnp.asarray(params[f"b{i}"]).reshape(1, -1).astype(jnp.float32)
    return prep


def my_dino_dyn_forward(t, u, prep, *, tm=512):
    """Pallas forward of MyDINoDyn.forward(t, u) == MLP(u); t is ignored.

    t    : ignored (API fidelity with the PyTorch module).
    u    : (..., input_dim) float array (any float dtype; cast in-kernel).
    prep : output of `prepare_dino_params` -- cache it across the many
           dynamics-net evaluations inside an ODE solve.
    """
    del t  # the PyTorch module ignores t

    in_dim = prep["w1"].shape[0]
    out_dim = prep["w4"].shape[1]

    orig_shape = u.shape
    x2d = u.reshape(-1, in_dim)
    n = x2d.shape[0]

    # Pad rows only to the f32 sublane multiple (8); the ragged last grid
    # block (if any) is masked by Pallas, so no full-tile padding copy.
    n_pad = _round_up(max(n, 1), 8)
    if n_pad != n:
        x2d = jnp.pad(x2d, ((0, n_pad - n), (0, 0)))

    # Row tile: large (better pipelining), multiple of 8, capped so there are
    # >= 2 grid steps whenever possible (so the "parallel" axis can shard
    # across v7x's two TensorCores; harmless on single-TC v5e/v6e).
    tm_eff = min(_round_up(tm, 8), n_pad)
    if n_pad >= 16:
        tm_eff = min(tm_eff, _round_up(pl.cdiv(n_pad, 2), 8))

    grid = (pl.cdiv(n_pad, tm_eff),)
    const = lambda i: (0, 0)  # weights/biases: same block every step -> stay resident

    out = pl.pallas_call(
        _mlp_swish_kernel,
        out_shape=jax.ShapeDtypeStruct((n_pad, out_dim), jnp.float32),
        grid_spec=pltpu.PrefetchScalarGridSpec(
            num_scalar_prefetch=0,
            grid=grid,
            in_specs=[
                pl.BlockSpec((tm_eff, in_dim), lambda i: (i, 0)),
                pl.BlockSpec(prep["w1"].shape, const), pl.BlockSpec(prep["b1"].shape, const),
                pl.BlockSpec(prep["w2"].shape, const), pl.BlockSpec(prep["b2"].shape, const),
                pl.BlockSpec(prep["w3"].shape, const), pl.BlockSpec(prep["b3"].shape, const),
                pl.BlockSpec(prep["w4"].shape, const), pl.BlockSpec(prep["b4"].shape, const),
            ],
            out_specs=pl.BlockSpec((tm_eff, out_dim), lambda i: (i, 0)),
        ),
        compiler_params=pltpu.CompilerParams(
            dimension_semantics=("parallel",),
        ),
        # TODO(synk): for scaled-up DINo configs on v7x, single-buffer the
        # resident weight specs (pipeline_mode=pl.Buffered(1)) and set
        # vmem_limit_bytes explicitly to keep the row tile large.
    )(x2d, prep["w1"], prep["b1"], prep["w2"], prep["b2"],
      prep["w3"], prep["b3"], prep["w4"], prep["b4"])

    out = out[:n]
    return out.reshape(*orig_shape[:-1], out_dim)


# ---------------------------------------------------------------------------
# Deterministic torch-like nn.Linear init (kaiming_uniform_(a=sqrt(5)) + bias).
# ---------------------------------------------------------------------------
def _torch_linear_init(key, out_features, in_features):
    kw, kb = jax.random.split(key)
    a = math.sqrt(5.0)
    gain = math.sqrt(2.0 / (1.0 + a * a))
    w_bound = gain * math.sqrt(3.0 / in_features)           # == 1/sqrt(fan_in)
    b_bound = 1.0 / math.sqrt(in_features)
    w = jax.random.uniform(kw, (out_features, in_features), jnp.float32,
                           minval=-w_bound, maxval=w_bound)
    b = jax.random.uniform(kb, (out_features,), jnp.float32,
                           minval=-b_bound, maxval=b_bound)
    return w, b


def _ref_forward(u, params):
    """Plain-JAX f32 reference identical to the PyTorch MLP([d,h,h,h,d], swish)."""
    h = u.astype(jnp.float32)
    for i in range(1, 5):
        w = params[f"w{i}"]
        b = params[f"b{i}"]
        h = h @ w.T + b
        if i < 4:
            h = h * jax.nn.sigmoid(h)
    return h


if __name__ == "__main__":
    key = jax.random.PRNGKey(0)
    k_u, k1, k2, k3, k4 = jax.random.split(key, 5)

    # Small shapes consistent with MyDINoDyn: input_dim = code_dim * state_channels.
    state_channels = 4
    code_dim = 32
    hidden_dim = 128
    input_dim = code_dim * state_channels      # 128 -> everything 128-lane dense
    batch, seq = 2, 8                          # 16 rows of codes

    dims = [input_dim, hidden_dim, hidden_dim, hidden_dim, input_dim]
    keys = [k1, k2, k3, k4]
    params = {}
    for i in range(4):
        w, b = _torch_linear_init(keys[i], dims[i + 1], dims[i])
        params[f"w{i + 1}"] = w
        params[f"b{i + 1}"] = b

    u = jax.random.normal(k_u, (batch, seq, input_dim), jnp.float32)
    t = jnp.float32(0.0)  # ignored by the module's forward

    prep = prepare_dino_params(params)          # once per parameter set
    out = my_dino_dyn_forward(t, u, prep, tm=512)
    out = jax.block_until_ready(out)

    ref = _ref_forward(u, params)
    assert out.shape == (batch, seq, input_dim)
    # bf16 matmul operands + approx reciprocal vs. a pure-f32 reference:
    # loosen tolerance accordingly (errors are ~1e-2 absolute at these scales).
    max_err = float(jnp.max(jnp.abs(out - ref)))
    assert jnp.allclose(out, ref, atol=5e-2, rtol=5e-2), max_err

    print("KERNEL_OK")
</pallas_src>

<mosaic_0001>
module attributes {stable_mosaic.version = 11 : i64} {
  func.func @_mlp_swish_kernel(%arg0: i32, %arg1: memref<8x128xf32, #tpu.memory_space<vmem>>, %arg2: memref<128x128xbf16, #tpu.memory_space<vmem>>, %arg3: memref<1x128xf32, #tpu.memory_space<vmem>>, %arg4: memref<128x128xbf16, #tpu.memory_space<vmem>>, %arg5: memref<1x128xf32, #tpu.memory_space<vmem>>, %arg6: memref<128x128xbf16, #tpu.memory_space<vmem>>, %arg7: memref<1x128xf32, #tpu.memory_space<vmem>>, %arg8: memref<128x128xbf16, #tpu.memory_space<vmem>>, %arg9: memref<1x128xf32, #tpu.memory_space<vmem>>, %arg10: memref<8x128xf32, #tpu.memory_space<vmem>>) attributes {dimension_semantics = [#tpu.dimension_semantics<parallel>], iteration_bounds = array<i64: 2>, scalar_prefetch = 0 : i64, scratch_operands = 0 : i64, tpu.core_type = #tpu.core_type<tc>, window_params = [{transform_indices = @transform_0, window_bounds = array<i64: 8, 128>}, {pipeline_mode = #tpu.pipeline_mode<synchronous>, transform_indices = @transform_1, window_bounds = array<i64: 128, 128>}, {pipeline_mode = #tpu.pipeline_mode<synchronous>, transform_indices = @transform_2, window_bounds = array<i64: 1, 128>}, {pipeline_mode = #tpu.pipeline_mode<synchronous>, transform_indices = @transform_3, window_bounds = array<i64: 128, 128>}, {pipeline_mode = #tpu.pipeline_mode<synchronous>, transform_indices = @transform_4, window_bounds = array<i64: 1, 128>}, {pipeline_mode = #tpu.pipeline_mode<synchronous>, transform_indices = @transform_5, window_bounds = array<i64: 128, 128>}, {pipeline_mode = #tpu.pipeline_mode<synchronous>, transform_indices = @transform_6, window_bounds = array<i64: 1, 128>}, {pipeline_mode = #tpu.pipeline_mode<synchronous>, transform_indices = @transform_7, window_bounds = array<i64: 128, 128>}, {pipeline_mode = #tpu.pipeline_mode<synchronous>, transform_indices = @transform_8, window_bounds = array<i64: 1, 128>}, {transform_indices = @transform_9, window_bounds = array<i64: 8, 128>}]} {
    %c0 = arith.constant 0 : index
    %c0_0 = arith.constant 0 : index
    %0 = vector.load %arg1[%c0, %c0_0] : memref<8x128xf32, #tpu.memory_space<vmem>>, vector<8x128xf32>
    %1 = arith.truncf %0 : vector<8x128xf32> to vector<8x128xbf16>
    %c0_1 = arith.constant 0 : index
    %c0_2 = arith.constant 0 : index
    %2 = vector.load %arg2[%c0_1, %c0_2] : memref<128x128xbf16, #tpu.memory_space<vmem>>, vector<128x128xbf16>
    %cst = arith.constant dense<0.000000e+00> : vector<8x128xf32>
    %3 = tpu.matmul %1, %2, %cst {dimension_numbers = #tpu.dot_dimension_numbers<[1], [0], [0], [1], [0, 0, 1, 1], [], []>} : vector<8x128xbf16>, vector<128x128xbf16>, vector<8x128xf32> -> vector<8x128xf32>
    %c0_3 = arith.constant 0 : index
    %c0_4 = arith.constant 0 : index
    %4 = vector.load %arg3[%c0_3, %c0_4] : memref<1x128xf32, #tpu.memory_space<vmem>>, vector<1x128xf32>
    %5 = vector.broadcast %4 : vector<1x128xf32> to vector<8x128xf32>
    %6 = arith.addf %3, %5 : vector<8x128xf32>
    %cst_5 = arith.constant 0.000000e+00 : f32
    %7 = vector.broadcast %cst_5 : f32 to vector<8x128xf32>
    %8 = arith.subf %7, %6 : vector<8x128xf32>
    %9 = math.exp %8 : vector<8x128xf32>
    %cst_6 = arith.constant 1.000000e+00 : f32
    %10 = vector.broadcast %cst_6 : f32 to vector<8x128xf32>
    %11 = arith.addf %10, %9 : vector<8x128xf32>
    %12 = tpu.reciprocal %11 {approx = true} : vector<8x128xf32> -> vector<8x128xf32>
    %13 = arith.mulf %6, %12 : vector<8x128xf32>
    %14 = arith.truncf %13 : vector<8x128xf32> to vector<8x128xbf16>
    %c0_7 = arith.constant 0 : index
    %c0_8 = arith.constant 0 : index
    %15 = vector.load %arg4[%c0_7, %c0_8] : memref<128x128xbf16, #tpu.memory_space<vmem>>, vector<128x128xbf16>
    %cst_9 = arith.constant dense<0.000000e+00> : vector<8x128xf32>
    %16 = tpu.matmul %14, %15, %cst_9 {dimension_numbers = #tpu.dot_dimension_numbers<[1], [0], [0], [1], [0, 0, 1, 1], [], []>} : vector<8x128xbf16>, vector<128x128xbf16>, vector<8x128xf32> -> vector<8x128xf32>
    %c0_10 = arith.constant 0 : index
    %c0_11 = arith.constant 0 : index
    %17 = vector.load %arg5[%c0_10, %c0_11] : memref<1x128xf32, #tpu.memory_space<vmem>>, vector<1x128xf32>
    %18 = vector.broadcast %17 : vector<1x128xf32> to vector<8x128xf32>
    %19 = arith.addf %16, %18 : vector<8x128xf32>
    %cst_12 = arith.constant 0.000000e+00 : f32
    %20 = vector.broadcast %cst_12 : f32 to vector<8x128xf32>
    %21 = arith.subf %20, %19 : vector<8x128xf32>
    %22 = math.exp %21 : vector<8x128xf32>
    %cst_13 = arith.constant 1.000000e+00 : f32
    %23 = vector.broadcast %cst_13 : f32 to vector<8x128xf32>
    %24 = arith.addf %23, %22 : vector<8x128xf32>
    %25 = tpu.reciprocal %24 {approx = true} : vector<8x128xf32> -> vector<8x128xf32>
    %26 = arith.mulf %19, %25 : vector<8x128xf32>
    %27 = arith.truncf %26 : vector<8x128xf32> to vector<8x128xbf16>
    %c0_14 = arith.constant 0 : index
    %c0_15 = arith.constant 0 : index
    %28 = vector.load %arg6[%c0_14, %c0_15] : memref<128x128xbf16, #tpu.memory_space<vmem>>, vector<128x128xbf16>
    %cst_16 = arith.constant dense<0.000000e+00> : vector<8x128xf32>
    %29 = tpu.matmul %27, %28, %cst_16 {dimension_numbers = #tpu.dot_dimension_numbers<[1], [0], [0], [1], [0, 0, 1, 1], [], []>} : vector<8x128xbf16>, vector<128x128xbf16>, vector<8x128xf32> -> vector<8x128xf32>
    %c0_17 = arith.constant 0 : index
    %c0_18 = arith.constant 0 : index
    %30 = vector.load %arg7[%c0_17, %c0_18] : memref<1x128xf32, #tpu.memory_space<vmem>>, vector<1x128xf32>
    %31 = vector.broadcast %30 : vector<1x128xf32> to vector<8x128xf32>
    %32 = arith.addf %29, %31 : vector<8x128xf32>
    %cst_19 = arith.constant 0.000000e+00 : f32
    %33 = vector.broadcast %cst_19 : f32 to vector<8x128xf32>
    %34 = arith.subf %33, %32 : vector<8x128xf32>
    %35 = math.exp %34 : vector<8x128xf32>
    %cst_20 = arith.constant 1.000000e+00 : f32
    %36 = vector.broadcast %cst_20 : f32 to vector<8x128xf32>
    %37 = arith.addf %36, %35 : vector<8x128xf32>
    %38 = tpu.reciprocal %37 {approx = true} : vector<8x128xf32> -> vector<8x128xf32>
    %39 = arith.mulf %32, %38 : vector<8x128xf32>
    %40 = arith.truncf %39 : vector<8x128xf32> to vector<8x128xbf16>
    %c0_21 = arith.constant 0 : index
    %c0_22 = arith.constant 0 : index
    %41 = vector.load %arg8[%c0_21, %c0_22] : memref<128x128xbf16, #tpu.memory_space<vmem>>, vector<128x128xbf16>
    %cst_23 = arith.constant dense<0.000000e+00> : vector<8x128xf32>
    %42 = tpu.matmul %40, %41, %cst_23 {dimension_numbers = #tpu.dot_dimension_numbers<[1], [0], [0], [1], [0, 0, 1, 1], [], []>} : vector<8x128xbf16>, vector<128x128xbf16>, vector<8x128xf32> -> vector<8x128xf32>
    %c0_24 = arith.constant 0 : index
    %c0_25 = arith.constant 0 : index
    %43 = vector.load %arg9[%c0_24, %c0_25] : memref<1x128xf32, #tpu.memory_space<vmem>>, vector<1x128xf32>
    %44 = vector.broadcast %43 : vector<1x128xf32> to vector<8x128xf32>
    %45 = arith.addf %42, %44 : vector<8x128xf32>
    %c0_26 = arith.constant 0 : index
    %c0_27 = arith.constant 0 : index
    %46 = vector.load %arg10[%c0_26, %c0_27] : memref<8x128xf32, #tpu.memory_space<vmem>>, vector<8x128xf32>
    tpu.vector_store %arg10[%c0_26, %c0_27], %45 {strides = array<i32>} : memref<8x128xf32, #tpu.memory_space<vmem>>, vector<8x128xf32>,
    return
  }
  func.func @transform_0(%arg0: i32) -> (i32, i32) {
    %c0_i32 = arith.constant 0 : i32
    %c0_i32_0 = arith.constant 0 : i32
    return %arg0, %c0_i32 : i32, i32
  }
  func.func @transform_1(%arg0: i32) -> (i32, i32) {
    %c0_i32 = arith.constant 0 : i32
    %c0_i32_0 = arith.constant 0 : i32
    %c0_i32_1 = arith.constant 0 : i32
    return %c0_i32, %c0_i32_0 : i32, i32
  }
  func.func @transform_2(%arg0: i32) -> (i32, i32) {
    %c0_i32 = arith.constant 0 : i32
    %c0_i32_0 = arith.constant 0 : i32
    %c0_i32_1 = arith.constant 0 : i32
    return %c0_i32, %c0_i32_0 : i32, i32
  }
  func.func @transform_3(%arg0: i32) -> (i32, i32) {
    %c0_i32 = arith.constant 0 : i32
    %c0_i32_0 = arith.constant 0 : i32
    %c0_i32_1 = arith.constant 0 : i32
    return %c0_i32, %c0_i32_0 : i32, i32
  }
  func.func @transform_4(%arg0: i32) -> (i32, i32) {
    %c0_i32 = arith.constant 0 : i32
    %c0_i32_0 = arith.constant 0 : i32
    %c0_i32_1 = arith.constant 0 : i32
    return %c0_i32, %c0_i32_0 : i32, i32
  }
  func.func @transform_5(%arg0: i32) -> (i32, i32) {
    %c0_i32 = arith.constant 0 : i32
    %c0_i32_0 = arith.constant 0 : i32
    %c0_i32_1 = arith.constant 0 : i32
    return %c0_i32, %c0_i32_0 : i32, i32
  }
  func.func @transform_6(%arg0: i32) -> (i32, i32) {
    %c0_i32 = arith.constant 0 : i32
    %c0_i32_0 = arith.constant 0 : i32
    %c0_i32_1 = arith.constant 0 : i32
    return %c0_i32, %c0_i32_0 : i32, i32
  }
  func.func @transform_7(%arg0: i32) -> (i32, i32) {
    %c0_i32 = arith.constant 0 : i32
    %c0_i32_0 = arith.constant 0 : i32
    %c0_i32_1 = arith.constant 0 : i32
    return %c0_i32, %c0_i32_0 : i32, i32
  }
  func.func @transform_8(%arg0: i32) -> (i32, i32) {
    %c0_i32 = arith.constant 0 : i32
    %c0_i32_0 = arith.constant 0 : i32
    %c0_i32_1 = arith.constant 0 : i32
    return %c0_i32, %c0_i32_0 : i32, i32
  }
  func.func @transform_9(%arg0: i32) -> (i32, i32) {
    %c0_i32 = arith.constant 0 : i32
    %c0_i32_0 = arith.constant 0 : i32
    return %arg0, %c0_i32 : i32, i32
  }
}

</mosaic_0001>

<llo_original>
// kernel: tpu_custom_call.1
$region0: #{tpu_custom_call.1}
  #allocation0 [shape = 'u32[]', space=smem, size = 0x4, offset = 0x4, fixed_abs, tag = 'smem constant byte address 0x4 - core index']
  #allocation1 [shape = 'u32[72,128]{1,0:T(1,128)}', space=vmem, size = 0x9000, scoped, tag = 'internal scratch']
  %s0 = inlined_call_operand.hbm [shape: f32[16,128], index: 0, kind: input, shape index: {}]
  %s1 = inlined_call_operand.hbm [shape: bf16[128,128], index: 1, kind: input, shape index: {}]
  %s2 = inlined_call_operand.vmem [shape: f32[1,128], index: 2, kind: input, shape index: {}]
  %s3 = inlined_call_operand.hbm [shape: bf16[128,128], index: 3, kind: input, shape index: {}]
  %s4 = inlined_call_operand.vmem [shape: f32[1,128], index: 4, kind: input, shape index: {}]
  %s5 = inlined_call_operand.hbm [shape: bf16[128,128], index: 5, kind: input, shape index: {}]
  %s6 = inlined_call_operand.vmem [shape: f32[1,128], index: 6, kind: input, shape index: {}]
  %s7 = inlined_call_operand.hbm [shape: bf16[128,128], index: 7, kind: input, shape index: {}]
  %s8 = inlined_call_operand.vmem [shape: f32[1,128], index: 8, kind: input, shape index: {}]
  %s9 = inlined_call_operand.hbm [shape: f32[16,128], index: 9, kind: output, shape index: {}]
  %s10 = sld [smem:[#allocation0]]
  $region89: #{tpu_custom_call.1} parent=0
    _
  %s12 = ssub.s32 1, %s10
  %s13 = scalar_select 0, %s12, %s10
  $region1: #{tpu_custom_call.1} parent=0
    #allocation2 [shape = 'u8[8192]{0}', space=vmem, size = 0x2000, scoped, tag = 'input window, operand 0']
    #allocation3 [shape = 's32[2]{0}', space=sflag, size = 0x8, scoped, tag = 'scoped memory for tpu_custom_call.1']
    #allocation4 [shape = 's32[2]{0}', space=sflag, size = 0x8, scoped, tag = 'scoped memory for tpu_custom_call.1']
    #allocation5 [shape = 'u8[32768]{0}', space=vmem, size = 0x8000, scoped, tag = 'input window, operand 1, single buffered']
    #allocation6 [shape = 's32[1]{0}', space=sflag, size = 0x4, scoped, tag = 'scoped memory for tpu_custom_call.1']
    #allocation7 [shape = 'u8[32768]{0}', space=vmem, size = 0x8000, scoped, tag = 'input window, operand 3, single buffered']
    #allocation8 [shape = 'u8[32768]{0}', space=vmem, size = 0x8000, scoped, tag = 'input window, operand 5, single buffered']
    #allocation9 [shape = 's32[1]{0}', space=sflag, size = 0x4, scoped, tag = 'scoped memory for tpu_custom_call.1']
    #allocation10 [shape = 'u8[32768]{0}', space=vmem, size = 0x8000, scoped, tag = 'input window, operand 7, single buffered']
    #allocation11 [shape = 'u8[8192]{0}', space=vmem, size = 0x2000, scoped, tag = 'output window, operand 0']
    %14 = vsyncpa [#allocation3], 0
    %s15 = scalar_lea.sflag [#allocation3], 1
    %16 = vsyncpa %s15, 0
    %17 = vsyncpa [#allocation6], 0
    %18 = vsyncpa [#allocation9], 0
    %19 = vsyncpa [#allocation4], 0
    %s20 = scalar_lea.sflag [#allocation4], 1
    %21 = vsyncpa %s20, 0
    loop: start=0, step=1, limit=4
    $region2: #{tpu_custom_call.1} parent=1 // loop_pre_header
      _
    $region3: #{tpu_custom_call.1} parent=1 // loop_header
      %s23 = sphi 0, %s27
      %p24 = scmp.ge.s32.totalorder %s23, 4
      %s33 = sphi 0, %s35
      %s36 = sphi 0, %s33
      %s37 = sphi 0, %s36
      %s53 = sphi 0, %s37
      %s57 = sphi 0, %s57
      %s59 = sphi 0, %s57
      %s60 = sphi 0, %s59
      %s74 = sphi 0, %s60
      %s78 = sphi 0, %s78
      %s80 = sphi 0, %s78
      %s81 = sphi 0, %s80
      %s95 = sphi 0, %s81
      %s99 = sphi 0, %s99
      %s101 = sphi 0, %s99
      %s102 = sphi 0, %s101
      %s116 = sphi 0, %s102
      %s120 = sphi 0, %s120
      %s122 = sphi 0, %s120
      %s123 = sphi 0, %s122
      %s137 = sphi 0, %s123
      %s141 = sphi 0, %s141
      %s143 = sphi 0, %s141
      %s144 = sphi 0, %s143
      %s158 = sphi 0, %s144
      %s162 = sphi 0, %s162
      %s164 = sphi 0, %s162
      %s165 = sphi 0, %s164
      %s179 = sphi 0, %s165
      %s183 = sphi 0, %s183
      %s185 = sphi 0, %s183
      %s186 = sphi 0, %s185
      %s200 = sphi 0, %s186
      %s204 = sphi 0, %s204
      %s206 = sphi 0, %s204
      %s207 = sphi 0, %s206
      %s221 = sphi 0, %s207
      %s227 = sphi 0, %s229
      %s230 = sphi 0, %s227
      %s231 = sphi 0, %s230
      %s247 = sphi 0, %s231
    $region4: #{tpu_custom_call.1} parent=1 // loop_header_branch
      %26 = sbr.rel (%p24) target = $region8
    $region5: #{tpu_custom_call.1} parent=1 // loop_body
      %s28 = ssub.s32 %s23, 1
      %s29 = ssub.s32 %s23, 2
      %s30 = sadd.s32 %s23, 1
      %s31 = ssub.s32 %s23, %s30
      %p32 = scmp.eq.s32.totalorder %s31, 0
      %s34 = sadd.s32 %s33, 1
      %s35 = scalar_select %p32, %s33, %s34
      %p38 = pneg %p32
      %p39 = scmp.eq.s32.totalorder %s23, 1
      %p40 = por %p38, %p39
      %p41 = scmp.ne.s32.totalorder %s33, %s36
      %p42 = scmp.eq.s32.totalorder %s23, 0
      %p43 = por %p41, %p42
      %p44 = scmp.ne.s32.totalorder %s33, %s36
      %p45 = scmp.eq.s32.totalorder %s28, 1
      %p46 = por %p44, %p45
      %p47 = scmp.ne.s32.totalorder %s36, %s37
      %p48 = scmp.eq.s32.totalorder %s28, 0
      %p49 = por %p47, %p48
      %p50 = scmp.ne.s32.totalorder %s36, %s37
      %p51 = scmp.eq.s32.totalorder %s29, 1
      %p52 = por %p50, %p51
      %p54 = scmp.ne.s32.totalorder %s37, %s53
      %p55 = scmp.eq.s32.totalorder %s29, 0
      %p56 = por %p54, %p55
      %s58 = sadd.s32 %s57, 1
      %p61 = scmp.eq.s32.totalorder %s23, 1
      %p62 = scmp.ne.s32.totalorder %s57, %s59
      %p63 = scmp.eq.s32.totalorder %s23, 0
      %p64 = por %p62, %p63
      %p65 = scmp.ne.s32.totalorder %s57, %s59
      %p66 = scmp.eq.s32.totalorder %s28, 1
      %p67 = por %p65, %p66
      %p68 = scmp.ne.s32.totalorder %s59, %s60
      %p69 = scmp.eq.s32.totalorder %s28, 0
      %p70 = por %p68, %p69
      %p71 = scmp.ne.s32.totalorder %s59, %s60
      %p72 = scmp.eq.s32.totalorder %s29, 1
      %p73 = por %p71, %p72
      %p75 = scmp.ne.s32.totalorder %s60, %s74
      %p76 = scmp.eq.s32.totalorder %s29, 0
      %p77 = por %p75, %p76
      %s79 = sadd.s32 %s78, 1
      %p82 = scmp.eq.s32.totalorder %s23, 1
      %p83 = scmp.ne.s32.totalorder %s78, %s80
      %p84 = scmp.eq.s32.totalorder %s23, 0
      %p85 = por %p83, %p84
      %p86 = scmp.ne.s32.totalorder %s78, %s80
      %p87 = scmp.eq.s32.totalorder %s28, 1
      %p88 = por %p86, %p87
      %p89 = scmp.ne.s32.totalorder %s80, %s81
      %p90 = scmp.eq.s32.totalorder %s28, 0
      %p91 = por %p89, %p90
      %p92 = scmp.ne.s32.totalorder %s80, %s81
      %p93 = scmp.eq.s32.totalorder %s29, 1
      %p94 = por %p92, %p93
      %p96 = scmp.ne.s32.totalorder %s81, %s95
      %p97 = scmp.eq.s32.totalorder %s29, 0
      %p98 = por %p96, %p97
      %s100 = sadd.s32 %s99, 1
      %p103 = scmp.eq.s32.totalorder %s23, 1
      %p104 = scmp.ne.s32.totalorder %s99, %s101
      %p105 = scmp.eq.s32.totalorder %s23, 0
      %p106 = por %p104, %p105
      %p107 = scmp.ne.s32.totalorder %s99, %s101
      %p108 = scmp.eq.s32.totalorder %s28, 1
      %p109 = por %p107, %p108
      %p110 = scmp.ne.s32.totalorder %s101, %s102
      %p111 = scmp.eq.s32.totalorder %s28, 0
      %p112 = por %p110, %p111
      %p113 = scmp.ne.s32.totalorder %s101, %s102
      %p114 = scmp.eq.s32.totalorder %s29, 1
      %p115 = por %p113, %p114
      %p117 = scmp.ne.s32.totalorder %s102, %s116
      %p118 = scmp.eq.s32.totalorder %s29, 0
      %p119 = por %p117, %p118
      %s121 = sadd.s32 %s120, 1
      %p124 = scmp.eq.s32.totalorder %s23, 1
      %p125 = scmp.ne.s32.totalorder %s120, %s122
      %p126 = scmp.eq.s32.totalorder %s23, 0
      %p127 = por %p125, %p126
      %p128 = scmp.ne.s32.totalorder %s120, %s122
      %p129 = scmp.eq.s32.totalorder %s28, 1
      %p130 = por %p128, %p129
      %p131 = scmp.ne.s32.totalorder %s122, %s123
      %p132 = scmp.eq.s32.totalorder %s28, 0
      %p133 = por %p131, %p132
      %p134 = scmp.ne.s32.totalorder %s122, %s123
      %p135 = scmp.eq.s32.totalorder %s29, 1
      %p136 = por %p134, %p135
      %p138 = scmp.ne.s32.totalorder %s123, %s137
      %p139 = scmp.eq.s32.totalorder %s29, 0
      %p140 = por %p138, %p139
      %s142 = sadd.s32 %s141, 1
      %p145 = scmp.eq.s32.totalorder %s23, 1
      %p146 = scmp.ne.s32.totalorder %s141, %s143
      %p147 = scmp.eq.s32.totalorder %s23, 0
      %p148 = por %p146, %p147
      %p149 = scmp.ne.s32.totalorder %s141, %s143
      %p150 = scmp.eq.s32.totalorder %s28, 1
      %p151 = por %p149, %p150
      %p152 = scmp.ne.s32.totalorder %s143, %s144
      %p153 = scmp.eq.s32.totalorder %s28, 0
      %p154 = por %p152, %p153
      %p155 = scmp.ne.s32.totalorder %s143, %s144
      %p156 = scmp.eq.s32.totalorder %s29, 1
      %p157 = por %p155, %p156
      %p159 = scmp.ne.s32.totalorder %s144, %s158
      %p160 = scmp.eq.s32.totalorder %s29, 0
      %p161 = por %p159, %p160
      %s163 = sadd.s32 %s162, 1
      %p166 = scmp.eq.s32.totalorder %s23, 1
      %p167 = scmp.ne.s32.totalorder %s162, %s164
      %p168 = scmp.eq.s32.totalorder %s23, 0
      %p169 = por %p167, %p168
      %p170 = scmp.ne.s32.totalorder %s162, %s164
      %p171 = scmp.eq.s32.totalorder %s28, 1
      %p172 = por %p170, %p171
      %p173 = scmp.ne.s32.totalorder %s164, %s165
      %p174 = scmp.eq.s32.totalorder %s28, 0
      %p175 = por %p173, %p174
      %p176 = scmp.ne.s32.totalorder %s164, %s165
      %p177 = scmp.eq.s32.totalorder %s29, 1
      %p178 = por %p176, %p177
      %p180 = scmp.ne.s32.totalorder %s165, %s179
      %p181 = scmp.eq.s32.totalorder %s29, 0
      %p182 = por %p180, %p181
      %s184 = sadd.s32 %s183, 1
      %p187 = scmp.eq.s32.totalorder %s23, 1
      %p188 = scmp.ne.s32.totalorder %s183, %s185
      %p189 = scmp.eq.s32.totalorder %s23, 0
      %p190 = por %p188, %p189
      %p191 = scmp.ne.s32.totalorder %s183, %s185
      %p192 = scmp.eq.s32.totalorder %s28, 1
      %p193 = por %p191, %p192
      %p194 = scmp.ne.s32.totalorder %s185, %s186
      %p195 = scmp.eq.s32.totalorder %s28, 0
      %p196 = por %p194, %p195
      %p197 = scmp.ne.s32.totalorder %s185, %s186
      %p198 = scmp.eq.s32.totalorder %s29, 1
      %p199 = por %p197, %p198
      %p201 = scmp.ne.s32.totalorder %s186, %s200
      %p202 = scmp.eq.s32.totalorder %s29, 0
      %p203 = por %p201, %p202
      %s205 = sadd.s32 %s204, 1
      %p208 = scmp.eq.s32.totalorder %s23, 1
      %p209 = scmp.ne.s32.totalorder %s204, %s206
      %p210 = scmp.eq.s32.totalorder %s23, 0
      %p211 = por %p209, %p210
      %p212 = scmp.ne.s32.totalorder %s204, %s206
      %p213 = scmp.eq.s32.totalorder %s28, 1
      %p214 = por %p212, %p213
      %p215 = scmp.ne.s32.totalorder %s206, %s207
      %p216 = scmp.eq.s32.totalorder %s28, 0
      %p217 = por %p215, %p216
      %p218 = scmp.ne.s32.totalorder %s206, %s207
      %p219 = scmp.eq.s32.totalorder %s29, 1
      %p220 = por %p218, %p219
      %p222 = scmp.ne.s32.totalorder %s207, %s221
      %p223 = scmp.eq.s32.totalorder %s29, 0
      %p224 = por %p222, %p223
      %s225 = ssub.s32 %s23, %s30
      %p226 = scmp.eq.s32.totalorder %s225, 0
      %s228 = sadd.s32 %s227, 1
      %s229 = scalar_select %p226, %s227, %s228
      %p232 = pneg %p226
      %p233 = scmp.eq.s32.totalorder %s23, 1
      %p234 = por %p232, %p233
      %p235 = scmp.ne.s32.totalorder %s227, %s230
      %p236 = scmp.eq.s32.totalorder %s23, 0
      %p237 = por %p235, %p236
      %p238 = scmp.ne.s32.totalorder %s227, %s230
      %p239 = scmp.eq.s32.totalorder %s28, 1
      %p240 = por %p238, %p239
      %p241 = scmp.ne.s32.totalorder %s230, %s231
      %p242 = scmp.eq.s32.totalorder %s28, 0
      %p243 = por %p241, %p242
      %p244 = scmp.ne.s32.totalorder %s230, %s231
      %p245 = scmp.eq.s32.totalorder %s29, 1
      %p246 = por %p244, %p245
      %p248 = scmp.ne.s32.totalorder %s231, %s247
      %p249 = scmp.eq.s32.totalorder %s29, 0
      %p250 = por %p248, %p249
      %p251 = scmp.le.s32.totalorder 1, %s23
      %p252 = scmp.lt.s32.totalorder %s23, 3
      %p253 = pnand %p251, %p252
      %p254 = pneg %p253
      // Predicated region
      $region9: #{tpu_custom_call.1} parent=5 // pred_check
        _
      $region10: #{tpu_custom_call.1} parent=5 // pred_check_branch
        %256 = sbr.rel (%p253) target = $region12
      $region11: #{tpu_custom_call.1} parent=5 // pred_region
        %s257 = ssub.s32 %s23, 1
        // Predicated region
        $region13: #{tpu_custom_call.1} parent=11 // pred_check
          %p258 = pneg %p70
        $region14: #{tpu_custom_call.1} parent=11 // pred_check_branch
          %260 = sbr.rel (%p258) target = $region16
        $region15: #{tpu_custom_call.1} parent=11 // pred_region
          %262 = vsyncadd [#allocation6], 0
          %s263 = sshll.u32 %s1, 4
          %s264 = int_to_ptr.hbm [resolvable:$true] %s263
          %s265 = sshll.u32 [#allocation5], 4
          %s266 = int_to_ptr.vmem [resolvable:$true] %s265
          %271 = dma.hbm_to_vmem [thread:$0]  %s264, 1024, %s266, [#allocation6], 64, 64, 4
        $region16: #{tpu_custom_call.1} parent=11 // pred_fallthru
          _
        // Predicated region
        $region17: #{tpu_custom_call.1} parent=11 // pred_check
          %p272 = pneg %p91
        $region18: #{tpu_custom_call.1} parent=11 // pred_check_branch
          %274 = sbr.rel (%p272) target = $region20
        $region19: #{tpu_custom_call.1} parent=11 // pred_region
          _
        $region20: #{tpu_custom_call.1} parent=11 // pred_fallthru
          _
        // Predicated region
        $region21: #{tpu_custom_call.1} parent=11 // pred_check
          %p275 = pneg %p112
        $region22: #{tpu_custom_call.1} parent=11 // pred_check_branch
          %277 = sbr.rel (%p275) target = $region24
        $region23: #{tpu_custom_call.1} parent=11 // pred_region
          %279 = vsyncadd [#allocation6], 0
          %s280 = sshll.u32 %s3, 4
          %s281 = int_to_ptr.hbm [resolvable:$true] %s280
          %s282 = sshll.u32 [#allocation7], 4
          %s283 = int_to_ptr.vmem [resolvable:$true] %s282
          %288 = dma.hbm_to_vmem [thread:$0]  %s281, 1024, %s283, [#allocation6], 64, 64, 4
        $region24: #{tpu_custom_call.1} parent=11 // pred_fallthru
          _
        // Predicated region
        $region25: #{tpu_custom_call.1} parent=11 // pred_check
          %p289 = pneg %p133
        $region26: #{tpu_custom_call.1} parent=11 // pred_check_branch
          %291 = sbr.rel (%p289) target = $region28
        $region27: #{tpu_custom_call.1} parent=11 // pred_region
          _
        $region28: #{tpu_custom_call.1} parent=11 // pred_fallthru
          _
        // Predicated region
        $region29: #{tpu_custom_call.1} parent=11 // pred_check
          %p292 = pneg %p154
        $region30: #{tpu_custom_call.1} parent=11 // pred_check_branch
          %294 = sbr.rel (%p292) target = $region32
        $region31: #{tpu_custom_call.1} parent=11 // pred_region
          %296 = vsyncadd [#allocation9], 0
          %s297 = sshll.u32 %s5, 4
          %s298 = int_to_ptr.hbm [resolvable:$true] %s297
          %s299 = sshll.u32 [#allocation8], 4
          %s300 = int_to_ptr.vmem [resolvable:$true] %s299
          %305 = dma.hbm_to_vmem [thread:$0]  %s298, 1024, %s300, [#allocation9], 64, 64, 4
        $region32: #{tpu_custom_call.1} parent=11 // pred_fallthru
          _
        // Predicated region
        $region33: #{tpu_custom_call.1} parent=11 // pred_check
          %p306 = pneg %p175
        $region34: #{tpu_custom_call.1} parent=11 // pred_check_branch
          %308 = sbr.rel (%p306) target = $region36
        $region35: #{tpu_custom_call.1} parent=11 // pred_region
          _
        $region36: #{tpu_custom_call.1} parent=11 // pred_fallthru
          _
        // Predicated region
        $region37: #{tpu_custom_call.1} parent=11 // pred_check
          %p309 = pneg %p196
        $region38: #{tpu_custom_call.1} parent=11 // pred_check_branch
          %311 = sbr.rel (%p309) target = $region40
        $region39: #{tpu_custom_call.1} parent=11 // pred_region
          %313 = vsyncadd [#allocation9], 0
          %s314 = sshll.u32 %s7, 4
          %s315 = int_to_ptr.hbm [resolvable:$true] %s314
          %s316 = sshll.u32 [#allocation10], 4
          %s317 = int_to_ptr.vmem [resolvable:$true] %s316
          %322 = dma.hbm_to_vmem [thread:$0]  %s315, 1024, %s317, [#allocation9], 64, 64, 4
        $region40: #{tpu_custom_call.1} parent=11 // pred_fallthru
          _
        // Predicated region
        $region41: #{tpu_custom_call.1} parent=11 // pred_check
          %p323 = pneg %p217
        $region42: #{tpu_custom_call.1} parent=11 // pred_check_branch
          %325 = sbr.rel (%p323) target = $region44
        $region43: #{tpu_custom_call.1} parent=11 // pred_region
          _
        $region44: #{tpu_custom_call.1} parent=11 // pred_fallthru
          _
      $region12: #{tpu_custom_call.1} parent=5 // pred_fallthru
        _
      %p326 = scmp.lt.s32.totalorder %s23, 2
      // Predicated region
      $region45: #{tpu_custom_call.1} parent=5 // pred_check
        %p327 = pneg %p326
      $region46: #{tpu_custom_call.1} parent=5 // pred_check_branch
        %329 = sbr.rel (%p327) target = $region48
      $region47: #{tpu_custom_call.1} parent=5 // pred_region
        // Predicated region
        $region49: #{tpu_custom_call.1} parent=47 // pred_check
          %p330 = pneg %p43
        $region50: #{tpu_custom_call.1} parent=47 // pred_check_branch
          %332 = sbr.rel (%p330) target = $region52
        $region51: #{tpu_custom_call.1} parent=47 // pred_region
          %s333 = sand.u32 %s33, 1
          %s334 = scalar_lea.sflag [#allocation3], %s333
          %s335 = sand.u32 %s33, 1
          %s336 = smul.addr %s335, 8
          %s337 = scalar_lea.vmem [#allocation2], %s336
          %339 = vsyncadd %s334, 0
          %s340 = smul.addr %s23, 8
          %s341 = scalar_lea.hbm %s0, %s340
          %s343 = sshll.u32 %s341, 4
          %s344 = int_to_ptr.hbm [resolvable:$true] %s343
          %s345 = sshll.u32 %s337, 4
          %s346 = int_to_ptr.vmem [resolvable:$true] %s345
          %348 = dma.hbm_to_vmem [thread:$0]  %s344, 128, %s346, %s334
        $region52: #{tpu_custom_call.1} parent=47 // pred_fallthru
          _
      $region48: #{tpu_custom_call.1} parent=5 // pred_fallthru
        _
      %p349 = scmp.le.s32.totalorder 1, %s23
      %p350 = scmp.lt.s32.totalorder %s23, 3
      %p351 = pnand %p349, %p350
      %p352 = pneg %p351
      // Predicated region
      $region53: #{tpu_custom_call.1} parent=5 // pred_check
        _
      $region54: #{tpu_custom_call.1} parent=5 // pred_check_branch
        %354 = sbr.rel (%p351) target = $region56
      $region55: #{tpu_custom_call.1} parent=5 // pred_region
        %s355 = ssub.s32 %s23, 1
        %s356 = sand.u32 %s36, 1
        %s357 = scalar_lea.sflag [#allocation3], %s356
        %s358 = sand.u32 %s36, 1
        %s359 = smul.addr %s358, 8
        %s360 = scalar_lea.vmem [#allocation2], %s359
        // Predicated region
        $region57: #{tpu_custom_call.1} parent=55 // pred_check
          %p361 = pneg %p49
        $region58: #{tpu_custom_call.1} parent=55 // pred_check_branch
          %363 = sbr.rel (%p361) target = $region60
        $region59: #{tpu_custom_call.1} parent=55 // pred_region
          %365 = dma.done %s357, 128
        $region60: #{tpu_custom_call.1} parent=55 // pred_fallthru
          _
        // Predicated region
        $region61: #{tpu_custom_call.1} parent=55 // pred_check
          %p366 = pneg %p70
        $region62: #{tpu_custom_call.1} parent=55 // pred_check_branch
          %368 = sbr.rel (%p366) target = $region64
        $region63: #{tpu_custom_call.1} parent=55 // pred_region
          %370 = dma.done [#allocation6], 1024
        $region64: #{tpu_custom_call.1} parent=55 // pred_fallthru
          _
        // Predicated region
        $region65: #{tpu_custom_call.1} parent=55 // pred_check
          %p371 = pneg %p112
        $region66: #{tpu_custom_call.1} parent=55 // pred_check_branch
          %373 = sbr.rel (%p371) target = $region68
        $region67: #{tpu_custom_call.1} parent=55 // pred_region
          %375 = dma.done [#allocation6], 1024
        $region68: #{tpu_custom_call.1} parent=55 // pred_fallthru
          _
        // Predicated region
        $region69: #{tpu_custom_call.1} parent=55 // pred_check
          %p376 = pneg %p154
        $region70: #{tpu_custom_call.1} parent=55 // pred_check_branch
          %378 = sbr.rel (%p376) target = $region72
        $region71: #{tpu_custom_call.1} parent=55 // pred_region
          %380 = dma.done [#allocation9], 1024
        $region72: #{tpu_custom_call.1} parent=55 // pred_fallthru
          _
        // Predicated region
        $region73: #{tpu_custom_call.1} parent=55 // pred_check
          %p381 = pneg %p196
        $region74: #{tpu_custom_call.1} parent=55 // pred_check_branch
          %383 = sbr.rel (%p381) target = $region76
        $region75: #{tpu_custom_call.1} parent=55 // pred_region
          %385 = dma.done [#allocation9], 1024
        $region76: #{tpu_custom_call.1} parent=55 // pred_fallthru
          _
        %s386 = sand.u32 %s36, 1
        %s387 = scalar_lea.sflag [#allocation3], %s386
        %s388 = sand.u32 %s36, 1
        %s389 = smul.addr %s388, 8
        %s390 = scalar_lea.vmem [#allocation2], %s389
        %p391 = pneg %p49
        %p392 = pneg %p46
        %p393 = pneg %p70
        %p394 = pneg %p67
        %p395 = pneg %p91
        %p396 = pneg %p88
        %p397 = pneg %p112
        %p398 = pneg %p109
        %p399 = pneg %p133
        %p400 = pneg %p130
        %p401 = pneg %p154
        %p402 = pneg %p151
        %p403 = pneg %p175
        %p404 = pneg %p172
        %p405 = pneg %p196
        %p406 = pneg %p193
        %p407 = pneg %p217
        %p408 = pneg %p214
        %p409 = pneg %p243
        %p410 = pneg %p240
        %s411 = sand.u32 %s230, 1
        %s412 = scalar_lea.sflag [#allocation4], %s411
        %s413 = sand.u32 %s230, 1
        %s414 = smul.addr %s413, 8
        %s415 = scalar_lea.vmem [#allocation11], %s414
        %v416 = vld [vmem:[%s360] sm:$0xff]
        %v417 = vpack.c.bf16 %v416, %v416
        %v418 = vld [vmem:[#allocation5] sm:$0xf]
        %v419 = vld [vmem:[#allocation5 + $0x4] sm:$0xf]
        %v420 = vld [vmem:[#allocation5 + $0x8] sm:$0xf]
        %v421 = vld [vmem:[#allocation5 + $0xc] sm:$0xf]
        %v422 = vld [vmem:[#allocation5 + $0x10] sm:$0xf]
        %v423 = vld [vmem:[#allocation5 + $0x14] sm:$0xf]
        %v424 = vld [vmem:[#allocation5 + $0x18] sm:$0xf]
        %v425 = vld [vmem:[#allocation5 + $0x1c] sm:$0xf]
        %v426 = vld [vmem:[#allocation5 + $0x20] sm:$0xf]
        %v427 = vld [vmem:[#allocation5 + $0x24] sm:$0xf]
        %v428 = vld [vmem:[#allocation5 + $0x28] sm:$0xf]
        %v429 = vld [vmem:[#allocation5 + $0x2c] sm:$0xf]
        %v430 = vld [vmem:[#allocation5 + $0x30] sm:$0xf]
        %v431 = vld [vmem:[#allocation5 + $0x34] sm:$0xf]
        %v432 = vld [vmem:[#allocation5 + $0x38] sm:$0xf]
        %v433 = vld [vmem:[#allocation5 + $0x3c] sm:$0xf]
        %v434 = vld [vmem:[%s2] sm:$0x1]
        %v436 = vperm.slane %v434, 0
        %v454 = vunpack.c.l.b16 %v418
        %v455 = vunpack.c.l.b16 %v419
        %v456 = vunpack.c.l.b16 %v420
        %v457 = vunpack.c.l.b16 %v421
        %v458 = vunpack.c.l.b16 %v422
        %v459 = vunpack.c.l.b16 %v423
        %v460 = vunpack.c.l.b16 %v424
        %v461 = vunpack.c.l.b16 %v425
        %v462 = vunpack.c.l.b16 %v426
        %v463 = vunpack.c.l.b16 %v427
        %v464 = vunpack.c.l.b16 %v428
        %v465 = vunpack.c.l.b16 %v429
        %v466 = vunpack.c.l.b16 %v430
        %v467 = vunpack.c.l.b16 %v431
        %v468 = vunpack.c.l.b16 %v432
        %v469 = vunpack.c.l.b16 %v433
        %v470 = vpack.c.b16 %v455, %v454
        %v471 = vpack.c.b16 %v457, %v456
        %v472 = vpack.c.b16 %v459, %v458
        %v473 = vpack.c.b16 %v461, %v460
        %v474 = vpack.c.b16 %v463, %v462
        %v475 = vpack.c.b16 %v465, %v464
        %v476 = vpack.c.b16 %v467, %v466
        %v477 = vpack.c.b16 %v469, %v468
        %486 = vmatpush.bf16.msra.mxu0 %v477
        %487 = vmatpush.bf16.msra.mxu0 %v476
        %488 = vmatpush.bf16.msra.mxu0 %v475
        %489 = vmatpush.bf16.msra.mxu0 %v474
        %490 = vmatpush.bf16.msra.mxu0 %v473
        %491 = vmatpush.bf16.msra.mxu0 %v472
        %492 = vmatpush.bf16.msra.mxu0 %v471
        %493 = vmatpush.bf16.msra.mxu0 %v470
        %494 = vmatmul.bf16.gmra.mxu0 %v417
        %v495 = vpop.f32.mrf.mxu0
        %v496 = vadd.f32 %v436, %v495
        %v497 = vpop.f32.mrf.mxu0
        %498 = vdwg.mxu0
        %v499 = vsub.f32 0.0, %v496
        %v500 = vmul.f32 %v499, 1.442695
        %v501 = vpow.pop %v500
        %v502 = vadd.f32 %v501, 1.0
        %v503 = vrcp.pop %v502
        %v504 = vmul.f32 %v496, %v503
        %v505 = vpack.c.bf16 %v504, %v504
        %v506 = vld [vmem:[#allocation7] sm:$0xf]
        %v507 = vld [vmem:[#allocation7 + $0x4] sm:$0xf]
        %v508 = vld [vmem:[#allocation7 + $0x8] sm:$0xf]
        %v509 = vld [vmem:[#allocation7 + $0xc] sm:$0xf]
        %v510 = vld [vmem:[#allocation7 + $0x10] sm:$0xf]
        %v511 = vld [vmem:[#allocation7 + $0x14] sm:$0xf]
        %v512 = vld [vmem:[#allocation7 + $0x18] sm:$0xf]
        %v513 = vld [vmem:[#allocation7 + $0x1c] sm:$0xf]
        %v514 = vld [vmem:[#allocation7 + $0x20] sm:$0xf]
        %v515 = vld [vmem:[#allocation7 + $0x24] sm:$0xf]
        %v516 = vld [vmem:[#allocation7 + $0x28] sm:$0xf]
        %v517 = vld [vmem:[#allocation7 + $0x2c] sm:$0xf]
        %v518 = vld [vmem:[#allocation7 + $0x30] sm:$0xf]
        %v519 = vld [vmem:[#allocation7 + $0x34] sm:$0xf]
        %v520 = vld [vmem:[#allocation7 + $0x38] sm:$0xf]
        %v521 = vld [vmem:[#allocation7 + $0x3c] sm:$0xf]
        %v522 = vld [vmem:[%s4] sm:$0x1]
        %v524 = vperm.slane %v522, 0
        %v542 = vunpack.c.l.b16 %v506
        %v543 = vunpack.c.l.b16 %v507
        %v544 = vunpack.c.l.b16 %v508
        %v545 = vunpack.c.l.b16 %v509
        %v546 = vunpack.c.l.b16 %v510
        %v547 = vunpack.c.l.b16 %v511
        %v548 = vunpack.c.l.b16 %v512
        %v549 = vunpack.c.l.b16 %v513
        %v550 = vunpack.c.l.b16 %v514
        %v551 = vunpack.c.l.b16 %v515
        %v552 = vunpack.c.l.b16 %v516
        %v553 = vunpack.c.l.b16 %v517
        %v554 = vunpack.c.l.b16 %v518
        %v555 = vunpack.c.l.b16 %v519
        %v556 = vunpack.c.l.b16 %v520
        %v557 = vunpack.c.l.b16 %v521
        %v558 = vpack.c.b16 %v543, %v542
        %v559 = vpack.c.b16 %v545, %v544
        %v560 = vpack.c.b16 %v547, %v546
        %v561 = vpack.c.b16 %v549, %v548
        %v562 = vpack.c.b16 %v551, %v550
        %v563 = vpack.c.b16 %v553, %v552
        %v564 = vpack.c.b16 %v555, %v554
        %v565 = vpack.c.b16 %v557, %v556
        %574 = vmatpush.bf16.msra.mxu0 %v565
        %575 = vmatpush.bf16.msra.mxu0 %v564
        %576 = vmatpush.bf16.msra.mxu0 %v563
        %577 = vmatpush.bf16.msra.mxu0 %v562
        %578 = vmatpush.bf16.msra.mxu0 %v561
        %579 = vmatpush.bf16.msra.mxu0 %v560
        %580 = vmatpush.bf16.msra.mxu0 %v559
        %581 = vmatpush.bf16.msra.mxu0 %v558
        %582 = vmatmul.bf16.gmra.mxu0 %v505
        %v583 = vpop.f32.mrf.mxu0
        %v584 = vadd.f32 %v524, %v583
        %v585 = vpop.f32.mrf.mxu0
        %586 = vdwg.mxu0
        %v587 = vsub.f32 0.0, %v584
        %v588 = vmul.f32 %v587, 1.442695
        %v589 = vpow.pop %v588
        %v590 = vadd.f32 %v589, 1.0
        %v591 = vrcp.pop %v590
        %v592 = vmul.f32 %v584, %v591
        %v593 = vpack.c.bf16 %v592, %v592
        %v594 = vld [vmem:[#allocation8] sm:$0xf]
        %v595 = vld [vmem:[#allocation8 + $0x4] sm:$0xf]
        %v596 = vld [vmem:[#allocation8 + $0x8] sm:$0xf]
        %v597 = vld [vmem:[#allocation8 + $0xc] sm:$0xf]
        %v598 = vld [vmem:[#allocation8 + $0x10] sm:$0xf]
        %v599 = vld [vmem:[#allocation8 + $0x14] sm:$0xf]
        %v600 = vld [vmem:[#allocation8 + $0x18] sm:$0xf]
        %v601 = vld [vmem:[#allocation8 + $0x1c] sm:$0xf]
        %v602 = vld [vmem:[#allocation8 + $0x20] sm:$0xf]
        %v603 = vld [vmem:[#allocation8 + $0x24] sm:$0xf]
        %v604 = vld [vmem:[#allocation8 + $0x28] sm:$0xf]
        %v605 = vld [vmem:[#allocation8 + $0x2c] sm:$0xf]
        %v606 = vld [vmem:[#allocation8 + $0x30] sm:$0xf]
        %v607 = vld [vmem:[#allocation8 + $0x34] sm:$0xf]
        %v608 = vld [vmem:[#allocation8 + $0x38] sm:$0xf]
        %v609 = vld [vmem:[#allocation8 + $0x3c] sm:$0xf]
        %v610 = vld [vmem:[%s6] sm:$0x1]
        %v612 = vperm.slane %v610, 0
        %v630 = vunpack.c.l.b16 %v594
        %v631 = vunpack.c.l.b16 %v595
        %v632 = vunpack.c.l.b16 %v596
        %v633 = vunpack.c.l.b16 %v597
        %v634 = vunpack.c.l.b16 %v598
        %v635 = vunpack.c.l.b16 %v599
        %v636 = vunpack.c.l.b16 %v600
        %v637 = vunpack.c.l.b16 %v601
        %v638 = vunpack.c.l.b16 %v602
        %v639 = vunpack.c.l.b16 %v603
        %v640 = vunpack.c.l.b16 %v604
        %v641 = vunpack.c.l.b16 %v605
        %v642 = vunpack.c.l.b16 %v606
        %v643 = vunpack.c.l.b16 %v607
        %v644 = vunpack.c.l.b16 %v608
        %v645 = vunpack.c.l.b16 %v609
        %v646 = vpack.c.b16 %v631, %v630
        %v647 = vpack.c.b16 %v633, %v632
        %v648 = vpack.c.b16 %v635, %v634
        %v649 = vpack.c.b16 %v637, %v636
        %v650 = vpack.c.b16 %v639, %v638
        %v651 = vpack.c.b16 %v641, %v640
        %v652 = vpack.c.b16 %v643, %v642
        %v653 = vpack.c.b16 %v645, %v644
        %662 = vmatpush.bf16.msra.mxu0 %v653
        %663 = vmatpush.bf16.msra.mxu0 %v652
        %664 = vmatpush.bf16.msra.mxu0 %v651
        %665 = vmatpush.bf16.msra.mxu0 %v650
        %666 = vmatpush.bf16.msra.mxu0 %v649
        %667 = vmatpush.bf16.msra.mxu0 %v648
        %668 = vmatpush.bf16.msra.mxu0 %v647
        %669 = vmatpush.bf16.msra.mxu0 %v646
        %670 = vmatmul.bf16.gmra.mxu0 %v593
        %v671 = vpop.f32.mrf.mxu0
        %v672 = vadd.f32 %v612, %v671
        %v673 = vpop.f32.mrf.mxu0
        %674 = vdwg.mxu0
        %v675 = vsub.f32 0.0, %v672
        %v676 = vmul.f32 %v675, 1.442695
        %v677 = vpow.pop %v676
        %v678 = vadd.f32 %v677, 1.0
        %v679 = vrcp.pop %v678
        %v680 = vmul.f32 %v672, %v679
        %v681 = vpack.c.bf16 %v680, %v680
        %v682 = vld [vmem:[#allocation10] sm:$0xf]
        %v683 = vld [vmem:[#allocation10 + $0x4] sm:$0xf]
        %v684 = vld [vmem:[#allocation10 + $0x8] sm:$0xf]
        %v685 = vld [vmem:[#allocation10 + $0xc] sm:$0xf]
        %v686 = vld [vmem:[#allocation10 + $0x10] sm:$0xf]
        %v687 = vld [vmem:[#allocation10 + $0x14] sm:$0xf]
        %v688 = vld [vmem:[#allocation10 + $0x18] sm:$0xf]
        %v689 = vld [vmem:[#allocation10 + $0x1c] sm:$0xf]
        %v690 = vld [vmem:[#allocation10 + $0x20] sm:$0xf]
        %v691 = vld [vmem:[#allocation10 + $0x24] sm:$0xf]
        %v692 = vld [vmem:[#allocation10 + $0x28] sm:$0xf]
        %v693 = vld [vmem:[#allocation10 + $0x2c] sm:$0xf]
        %v694 = vld [vmem:[#allocation10 + $0x30] sm:$0xf]
        %v695 = vld [vmem:[#allocation10 + $0x34] sm:$0xf]
        %v696 = vld [vmem:[#allocation10 + $0x38] sm:$0xf]
        %v697 = vld [vmem:[#allocation10 + $0x3c] sm:$0xf]
        %v698 = vld [vmem:[%s8] sm:$0x1]
        %v700 = vperm.slane %v698, 0
        %v718 = vunpack.c.l.b16 %v682
        %v719 = vunpack.c.l.b16 %v683
        %v720 = vunpack.c.l.b16 %v684
        %v721 = vunpack.c.l.b16 %v685
        %v722 = vunpack.c.l.b16 %v686
        %v723 = vunpack.c.l.b16 %v687
        %v724 = vunpack.c.l.b16 %v688
        %v725 = vunpack.c.l.b16 %v689
        %v726 = vunpack.c.l.b16 %v690
        %v727 = vunpack.c.l.b16 %v691
        %v728 = vunpack.c.l.b16 %v692
        %v729 = vunpack.c.l.b16 %v693
        %v730 = vunpack.c.l.b16 %v694
        %v731 = vunpack.c.l.b16 %v695
        %v732 = vunpack.c.l.b16 %v696
        %v733 = vunpack.c.l.b16 %v697
        %v734 = vpack.c.b16 %v719, %v718
        %v735 = vpack.c.b16 %v721, %v720
        %v736 = vpack.c.b16 %v723, %v722
        %v737 = vpack.c.b16 %v725, %v724
        %v738 = vpack.c.b16 %v727, %v726
        %v739 = vpack.c.b16 %v729, %v728
        %v740 = vpack.c.b16 %v731, %v730
        %v741 = vpack.c.b16 %v733, %v732
        %750 = vmatpush.bf16.msra.mxu0 %v741
        %751 = vmatpush.bf16.msra.mxu0 %v740
        %752 = vmatpush.bf16.msra.mxu0 %v739
        %753 = vmatpush.bf16.msra.mxu0 %v738
        %754 = vmatpush.bf16.msra.mxu0 %v737
        %755 = vmatpush.bf16.msra.mxu0 %v736
        %756 = vmatpush.bf16.msra.mxu0 %v735
        %757 = vmatpush.bf16.msra.mxu0 %v734
        %758 = vmatmul.bf16.gmra.mxu0 %v681
        %v759 = vpop.f32.mrf.mxu0
        %v760 = vadd.f32 %v700, %v759
        %v761 = vpop.f32.mrf.mxu0
        %762 = vdwg.mxu0
        %763 = vst [vmem:[%s415] sm:$0xff] %v760
        %s764 = sand.u32 %s230, 1
        %s765 = scalar_lea.sflag [#allocation4], %s764
        %s766 = sand.u32 %s230, 1
        %s767 = smul.addr %s766, 8
        %s768 = scalar_lea.vmem [#allocation11], %s767
        // Predicated region
        $region77: #{tpu_custom_call.1} parent=55 // pred_check
          %p769 = pneg %p240
        $region78: #{tpu_custom_call.1} parent=55 // pred_check_branch
          %771 = sbr.rel (%p769) target = $region80
        $region79: #{tpu_custom_call.1} parent=55 // pred_region
          %773 = vsyncadd %s765, 0
          %s774 = smul.addr %s28, 8
          %s775 = scalar_lea.hbm %s9, %s774
          %s777 = sshll.u32 %s768, 4
          %s778 = int_to_ptr.vmem [resolvable:$true] %s777
          %s779 = sshll.u32 %s775, 4
          %s780 = int_to_ptr.hbm [resolvable:$true] %s779
          %782 = dma.vmem_to_hbm [thread:$0]  %s778, 128, %s780, %s765
        $region80: #{tpu_custom_call.1} parent=55 // pred_fallthru
          _
      $region56: #{tpu_custom_call.1} parent=5 // pred_fallthru
        _
      %p783 = scmp.le.s32.totalorder 2, %s23
      // Predicated region
      $region81: #{tpu_custom_call.1} parent=5 // pred_check
        %p784 = pneg %p783
      $region82: #{tpu_custom_call.1} parent=5 // pred_check_branch
        %786 = sbr.rel (%p784) target = $region84
      $region83: #{tpu_custom_call.1} parent=5 // pred_region
        %s787 = ssub.s32 %s23, 2
        // Predicated region
        $region85: #{tpu_custom_call.1} parent=83 // pred_check
          %p788 = pneg %p246
        $region86: #{tpu_custom_call.1} parent=83 // pred_check_branch
          %790 = sbr.rel (%p788) target = $region88
        $region87: #{tpu_custom_call.1} parent=83 // pred_region
          %s791 = sand.u32 %s231, 1
          %s792 = scalar_lea.sflag [#allocation4], %s791
          %s793 = sand.u32 %s231, 1
          %s794 = smul.addr %s793, 8
          %s795 = scalar_lea.vmem [#allocation11], %s794
          %797 = dma.done %s792, 128
        $region88: #{tpu_custom_call.1} parent=83 // pred_fallthru
          _
      $region84: #{tpu_custom_call.1} parent=5 // pred_fallthru
        _
    $region6: #{tpu_custom_call.1} parent=1 // loop_footer
      %s27 = sadd.s32 1, %s23
    $region7: #{tpu_custom_call.1} parent=1 // loop_footer_branch
      %22 = sbr.rel target = $region3
    $region8: #{tpu_custom_call.1} parent=1 // loop_exit
      _
    %798 = vsyncpa [#allocation3], 1
    %s799 = scalar_lea.sflag [#allocation3], 1
    %800 = vsyncpa %s799, 1
    %801 = vsyncpa [#allocation6], 1
    %802 = vsyncpa [#allocation9], 1
    %803 = vsyncpa [#allocation4], 1
    %s804 = scalar_lea.sflag [#allocation4], 1
    %805 = vsyncpa %s804, 1

</llo_original>
